<compile_context>
chip_gen: v7x
topology: tpu7x:2x2x1
jax: 0.10.0
libtpu: 0.0.40
codegen_flags: <defaults>
</compile_context>

<pallas_src>
import math

import jax
import jax.numpy as jnp
from jax.experimental import pallas as pl
from jax.experimental.pallas import tpu as pltpu

NUM_CLASSES = 100
NUM_STRIPES = 4
C_IN = 1024        # DenseNet121 feature channels (fixed by the module)
C_LOCAL = 256      # local_conv output channels (fixed by the module)
BN_EPS = 1e-5


# ----------------------------------------------------------------------------
# Small helpers
# ----------------------------------------------------------------------------
def _round_up(n, m):
    return ((n + m - 1) // m) * m


def _pad_last(a, target):
    pad = target - a.shape[-1]
    if pad == 0:
        return a
    cfg = [(0, 0)] * (a.ndim - 1) + [(0, pad)]
    return jnp.pad(a, cfg)


def _choose_group(C, HW, max_g=32):
    """Smallest G with C % G == 0 and (G*HW) % 128 == 0 (lane-dense rows)."""
    g = 128 // math.gcd(HW, 128)
    if g <= max_g and C % g == 0:
        return g
    return 1  # fallback: ungrouped (correct, just less lane-dense)


def _pool_matrices(H, W, S, G, x_dtype):
    """Block-diagonal 0/1 pooling matrix (pre-transposed) + f32 scales.

    pmat_t: (G*(S+1), G*HW) in the input dtype.  Row g*(S+1)+s sums stripe s
            of the g-th channel of a G-channel group; row g*(S+1)+S sums all
            of that channel (global pool).
    scale:  (G*(S+1), 1) f32: 1/(rows_per_stripe*W) for stripe rows, 1/HW for
            the global row.  Normalisation kept in f32, applied post-matmul.
    """
    hw = H * W
    rows = H // S
    stripe_id = jnp.arange(hw) // (rows * W)                         # flat = h*W + w
    cols = (stripe_id[:, None] == jnp.arange(S)[None, :]).astype(jnp.float32)
    cols = jnp.concatenate([cols, jnp.ones((hw, 1), jnp.float32)], axis=1)   # (HW,S+1)
    eye = jnp.eye(G, dtype=jnp.float32)
    pmat = jnp.einsum("ab,ij->aibj", eye, cols).reshape(G * hw, G * (S + 1))
    scale1 = jnp.concatenate([jnp.full((S,), 1.0 / (rows * W), jnp.float32),
                              jnp.full((1,), 1.0 / hw, jnp.float32)])
    scale = jnp.tile(scale1, G).reshape(G * (S + 1), 1)
    return pmat.T.astype(x_dtype), scale


def _row_block(rows, lane_width, itemsize, max_bytes=4 << 20):
    """Largest multiple-of-128 row tile that divides `rows`, stays under
    ~max_bytes per buffer, and (when possible) leaves >= 2 grid steps so the
    HBM-bound pass can be pipelined and megacore-split on v7x."""
    lane_pad = _round_up(lane_width, 128)
    cap = max(128, max_bytes // (lane_pad * itemsize))
    cands = [m for m in range(128, rows + 1, 128) if rows % m == 0 and m <= cap]
    multi = [m for m in cands if rows // m >= 2]
    if multi:
        return max(multi)
    if cands:
        return max(cands)
    return rows            # tiny-input fallback: single whole-array block


# ----------------------------------------------------------------------------
# Kernel 1: fused global + stripe pooling (the only HBM pass over the map).
#   x_g:    (B*C/G, G*HW)   -- free row-major reshape of the NCHW feature map
#   pmat_t: (G*(S+1), G*HW) -- 0/1 block-diagonal pooling matrix (input dtype)
#   scale:  (G*(S+1), 1)    -- f32 normalisation, applied after the matmul
#   out:    (G*(S+1), B*C/G) f32, already transposed -> lane-dense stores.
# ----------------------------------------------------------------------------
def _pool_kernel(x_ref, pt_ref, s_ref, out_ref):
    # (Gs, L) . (mt, L)^T via contract-last-with-last (flash-attention style):
    # the result is produced already transposed, so the store's last dim is mt
    # (a multiple of 128) -> unmasked lane-dense vst.
    acc = jax.lax.dot_general(
        pt_ref[...], x_ref[...],
        dimension_numbers=(((1,), (1,)), ((), ())),
        preferred_element_type=jnp.float32)          # (Gs, mt) f32
    out_ref[...] = acc * s_ref[...]                  # f32 normalisation


def fused_pool(x_g, pmat_t, scale):
    Rg, L = x_g.shape
    Gs = pmat_t.shape[0]
    mt = _row_block(Rg, L, x_g.dtype.itemsize)
    cost = pl.CostEstimate(
        flops=2 * Rg * L * Gs,
        transcendentals=0,
        bytes_accessed=Rg * L * x_g.dtype.itemsize + Gs * Rg * 4)
    return pl.pallas_call(
        _pool_kernel,
        out_shape=jax.ShapeDtypeStruct((Gs, Rg), jnp.float32),
        grid=(Rg // mt,),
        in_specs=[pl.BlockSpec((mt, L), lambda i: (i, 0)),
                  pl.BlockSpec((Gs, L), lambda i: (0, 0)),
                  pl.BlockSpec((Gs, 1), lambda i: (0, 0))],
        out_specs=pl.BlockSpec((Gs, mt), lambda i: (0, i)),
        compiler_params=pltpu.CompilerParams(
            dimension_semantics=("parallel",)),
        cost_estimate=cost,
    )(x_g, pmat_t, scale)


# ----------------------------------------------------------------------------
# Kernel 2: single-invocation head.
#   pooled2d: ((S+1)*B, C)  rows [0, S*B) = stripe means (stripe-major),
#                           rows [S*B, (S+1)*B) = global mean (gf).
#   One K=1024 matmul covers BOTH the shared 1x1 conv (first CL columns, then
#   folded BN + ReLU) and the global classifier (last NCp columns, then bias).
#   The S per-stripe fc heads run as one batched contraction.
# ----------------------------------------------------------------------------
def _head_kernel(pooled_ref, w_ref, scale_ref, shift_ref, wfc_ref, bfc_ref,
                 gfout_ref, h_ref, logit_ref):
    S, B, CL = h_ref.shape
    SB = S * B
    y = jnp.dot(pooled_ref[...], w_ref[...],
                preferred_element_type=jnp.float32)          # ((S+1)*B, CL+NCp)
    y = y * scale_ref[...] + shift_ref[...]                  # BN fold / cls bias
    gfout_ref[...] = y[SB:, CL:]                             # classifier(gf)
    h = jnp.maximum(y[:SB, :CL], 0.0)                        # conv+BN+ReLU (stripes)
    h3 = h.reshape(S, B, CL)
    h_ref[...] = h3
    logit_ref[...] = jax.lax.dot_general(                    # all S fc heads at once
        h3, wfc_ref[...],
        dimension_numbers=(((2,), (1,)), ((0,), (0,))),
        preferred_element_type=jnp.float32) + bfc_ref[...]


def head_call(pooled2d, w_comb, scale_comb, shift_comb, w_fc, b_fc, *, S, B):
    SB1, C = pooled2d.shape
    N_comb = w_comb.shape[1]
    CL = w_fc.shape[1]
    NCp = w_fc.shape[2]
    return pl.pallas_call(
        _head_kernel,
        out_shape=(jax.ShapeDtypeStruct((B, NCp), jnp.float32),
                   jax.ShapeDtypeStruct((S, B, CL), jnp.float32),
                   jax.ShapeDtypeStruct((S, B, NCp), jnp.float32)),
        grid=(1,),
        in_specs=[pl.BlockSpec((SB1, C), lambda i: (0, 0)),
                  pl.BlockSpec((C, N_comb), lambda i: (0, 0)),
                  pl.BlockSpec((1, N_comb), lambda i: (0, 0)),
                  pl.BlockSpec((1, N_comb), lambda i: (0, 0)),
                  pl.BlockSpec((S, CL, NCp), lambda i: (0, 0, 0)),
                  pl.BlockSpec((S, 1, NCp), lambda i: (0, 0, 0))],
        out_specs=(pl.BlockSpec((B, NCp), lambda i: (0, 0)),
                   pl.BlockSpec((S, B, CL), lambda i: (0, 0, 0)),
                   pl.BlockSpec((S, B, NCp), lambda i: (0, 0, 0))),
        compiler_params=pltpu.CompilerParams(
            dimension_semantics=("arbitrary",)),
    )(pooled2d, w_comb, scale_comb, shift_comb, w_fc, b_fc)


# ----------------------------------------------------------------------------
# Parameters (deterministic, synthetic; shapes as in DensePCB.__init__)
# ----------------------------------------------------------------------------
def init_params(key, num_classes=NUM_CLASSES, num_stripes=NUM_STRIPES):
    k1, k2, k3 = jax.random.split(key, 3)
    # classifier = nn.Linear(1024, num_classes)   (weight stored transposed)
    w_cls = jax.random.normal(k1, (C_IN, num_classes), jnp.float32) * 0.02
    b_cls = jnp.zeros((1, num_classes), jnp.float32)
    # local_conv = Conv2d(1024, 256, 1) + BatchNorm2d(256) + ReLU (shared)
    w_local = jax.random.normal(k2, (C_IN, C_LOCAL), jnp.float32) * 0.02
    b_conv = jnp.zeros((C_LOCAL,), jnp.float32)
    gamma = jnp.ones((C_LOCAL,), jnp.float32)
    beta = jnp.zeros((C_LOCAL,), jnp.float32)
    running_mean = jnp.zeros((C_LOCAL,), jnp.float32)
    running_var = jnp.ones((C_LOCAL,), jnp.float32)
    scale = gamma / jnp.sqrt(running_var + BN_EPS)
    shift = (b_conv - running_mean) * scale + beta
    # fc_list: num_stripes x Linear(256, num_classes), weight ~ N(0, 0.001), bias 0
    w_fc = jax.random.normal(k3, (num_stripes, C_LOCAL, num_classes),
                             jnp.float32) * 0.001
    b_fc = jnp.zeros((num_stripes, 1, num_classes), jnp.float32)
    return dict(w_cls=w_cls, b_cls=b_cls, w_local=w_local,
                bn_scale=scale.reshape(1, C_LOCAL),
                bn_shift=shift.reshape(1, C_LOCAL),
                w_fc=w_fc, b_fc=b_fc)


# ----------------------------------------------------------------------------
# Forward (mirrors DensePCB.forward return logic; share_conv=True)
# ----------------------------------------------------------------------------
def dense_pcb_forward(densenet_features, params, *, training=False,
                      use_pcb=False, num_stripes=NUM_STRIPES):
    B, C, H, W = densenet_features.shape
    assert H % num_stripes == 0, "Image height cannot be divided by num_strides"
    S = num_stripes
    HW = H * W
    NC = params["w_cls"].shape[1]
    NCp = _round_up(NC, 128)                         # lane-dense padded class dim

    # --- single HBM pass over the feature map (NCHW kept; reshapes are free) ---
    G = _choose_group(C, HW)
    x_g = densenet_features.reshape(B * C // G, G * HW)
    pmat_t, pscale = _pool_matrices(H, W, S, G, densenet_features.dtype)
    pooled_g = fused_pool(x_g, pmat_t, pscale)       # (G*(S+1), B*C/G) f32

    # --- tiny unpack of the pooled tensor only (a few tens of KiB) ---
    pooled_t = (pooled_g.reshape(G, S + 1, B, C // G)
                .transpose(1, 2, 3, 0)
                .reshape(S + 1, B, C))               # (S+1, B, C) f32
    gf = pooled_t[S]                                 # (B, 1024) global mean
    pooled2d = pooled_t.reshape((S + 1) * B, C)      # stripe rows first, gf last

    # --- classifier padded to 128 lanes and fused with local_conv weights ---
    w_cls = _pad_last(params["w_cls"], NCp)
    b_cls = _pad_last(params["b_cls"], NCp)
    w_fc = _pad_last(params["w_fc"], NCp)
    b_fc = _pad_last(params["b_fc"], NCp)
    w_comb = jnp.concatenate([params["w_local"], w_cls], axis=1)       # (C, CL+NCp)
    scale_comb = jnp.concatenate(
        [params["bn_scale"], jnp.ones((1, NCp), jnp.float32)], axis=1)
    shift_comb = jnp.concatenate([params["bn_shift"], b_cls], axis=1)

    # TODO(synk): nn.Dropout(p=0.5) on features_G (training mode only) not implemented.
    gf_out_p, h, logits_p = head_call(pooled2d, w_comb, scale_comb, shift_comb,
                                      w_fc, b_fc, S=S, B=B)

    gf_out = gf_out_p[:, :NC]                        # (B, NC)
    feat_pcb = jnp.transpose(h, (1, 2, 0))           # (B, 256, S)
    logits_list = [logits_p[s, :, :NC] for s in range(S)]

    if training:
        if use_pcb:
            return logits_list, gf_out, feat_pcb, gf
        return gf_out, gf
    else:
        if use_pcb:
            return feat_pcb, gf
        return gf


# Pure-JAX reference for correctness checking.
def dense_pcb_reference(feat, params, num_stripes=NUM_STRIPES):
    B, C, H, W = feat.shape
    gf = jnp.mean(feat, axis=(2, 3))
    gf_out = gf @ params["w_cls"] + params["b_cls"][0]
    rows = H // num_stripes
    fG = jnp.mean(feat.reshape(B, C, num_stripes, rows, W), axis=(3, 4))  # (B,C,S)
    h = jnp.einsum("bcs,cd->bds", fG, params["w_local"])
    h = h * params["bn_scale"][0][None, :, None] + params["bn_shift"][0][None, :, None]
    h = jnp.maximum(h, 0.0)                                                # (B,256,S)
    logits = jnp.einsum("bds,sdn->sbn", h, params["w_fc"]) + params["b_fc"]
    return gf, gf_out, h, logits


if __name__ == "__main__":
    key = jax.random.PRNGKey(0)
    kp, kx = jax.random.split(key)
    params = init_params(kp)

    B, H, W = 2, 8, 4   # small synthetic backbone feature map (B, 1024, 8, 4)
    feat = jax.random.normal(kx, (B, C_IN, H, W), jnp.float32)

    # eval path (use_pcb=True) -> (feat_pcb, gf)
    feat_pcb, gf = dense_pcb_forward(feat, params, training=False, use_pcb=True)
    # training path (use_pcb=True) -> (logits_list, gf_out, feat_pcb, gf)
    logits_list, gf_out, feat_pcb_t, gf_t = dense_pcb_forward(
        feat, params, training=True, use_pcb=True)
    jax.block_until_ready((feat_pcb, gf, gf_out, feat_pcb_t, gf_t, *logits_list))

    gf_r, gf_out_r, h_r, logits_r = dense_pcb_reference(feat, params)
    assert jnp.allclose(gf, gf_r, atol=1e-4, rtol=1e-4)
    assert jnp.allclose(feat_pcb, h_r, atol=1e-4, rtol=1e-4)
    assert jnp.allclose(gf_out, gf_out_r, atol=1e-4, rtol=1e-4)
    for s in range(NUM_STRIPES):
        assert jnp.allclose(logits_list[s], logits_r[s], atol=1e-4, rtol=1e-4)

    print("KERNEL_OK")
</pallas_src>

<mosaic_0001>
module attributes {stable_mosaic.version = 11 : i64} {
  func.func @_pool_kernel(%arg0: i32, %arg1: memref<256x128xf32, #tpu.memory_space<vmem>>, %arg2: memref<20x128xf32, #tpu.memory_space<vmem>>, %arg3: memref<20x1xf32, #tpu.memory_space<vmem>>, %arg4: memref<20x256xf32, #tpu.memory_space<vmem>>) attributes {dimension_semantics = [#tpu.dimension_semantics<parallel>], iteration_bounds = array<i64: 2>, scalar_prefetch = 0 : i64, scratch_operands = 0 : i64, tpu.core_type = #tpu.core_type<tc>, window_params = [{transform_indices = @transform_0, window_bounds = array<i64: 256, 128>}, {pipeline_mode = #tpu.pipeline_mode<synchronous>, transform_indices = @transform_1, window_bounds = array<i64: 20, 128>}, {pipeline_mode = #tpu.pipeline_mode<synchronous>, transform_indices = @transform_2, window_bounds = array<i64: 20, 1>}, {transform_indices = @transform_3, window_bounds = array<i64: 20, 256>}]} {
    %c0 = arith.constant 0 : index
    %c0_0 = arith.constant 0 : index
    %0 = vector.load %arg2[%c0, %c0_0] : memref<20x128xf32, #tpu.memory_space<vmem>>, vector<20x128xf32>
    %c0_1 = arith.constant 0 : index
    %c0_2 = arith.constant 0 : index
    %1 = vector.load %arg1[%c0_1, %c0_2] : memref<256x128xf32, #tpu.memory_space<vmem>>, vector<256x128xf32>
    %cst = arith.constant dense<0.000000e+00> : vector<20x256xf32>
    %2 = tpu.matmul %0, %1, %cst {dimension_numbers = #tpu.dot_dimension_numbers<[1], [1], [0], [0], [0, 0, 1, 0], [], []>} : vector<20x128xf32>, vector<256x128xf32>, vector<20x256xf32> -> vector<20x256xf32>
    %c0_3 = arith.constant 0 : index
    %c0_4 = arith.constant 0 : index
    %3 = vector.load %arg3[%c0_3, %c0_4] : memref<20x1xf32, #tpu.memory_space<vmem>>, vector<20x1xf32>
    %4 = vector.broadcast %3 : vector<20x1xf32> to vector<20x256xf32>
    %5 = arith.mulf %2, %4 : vector<20x256xf32>
    %c0_5 = arith.constant 0 : index
    %c0_6 = arith.constant 0 : index
    %6 = vector.load %arg4[%c0_5, %c0_6] : memref<20x256xf32, #tpu.memory_space<vmem>>, vector<20x256xf32>
    tpu.vector_store %arg4[%c0_5, %c0_6], %5 {strides = array<i32>} : memref<20x256xf32, #tpu.memory_space<vmem>>, vector<20x256xf32>,
    return
  }
  func.func @transform_0(%arg0: i32) -> (i32, i32) {
    %c0_i32 = arith.constant 0 : i32
    %c0_i32_0 = arith.constant 0 : i32
    return %arg0, %c0_i32 : i32, i32
  }
  func.func @transform_1(%arg0: i32) -> (i32, i32) {
    %c0_i32 = arith.constant 0 : i32
    %c0_i32_0 = arith.constant 0 : i32
    %c0_i32_1 = arith.constant 0 : i32
    return %c0_i32, %c0_i32_0 : i32, i32
  }
  func.func @transform_2(%arg0: i32) -> (i32, i32) {
    %c0_i32 = arith.constant 0 : i32
    %c0_i32_0 = arith.constant 0 : i32
    %c0_i32_1 = arith.constant 0 : i32
    return %c0_i32, %c0_i32_0 : i32, i32
  }
  func.func @transform_3(%arg0: i32) -> (i32, i32) {
    %c0_i32 = arith.constant 0 : i32
    %c0_i32_0 = arith.constant 0 : i32
    return %c0_i32, %arg0 : i32, i32
  }
}

</mosaic_0001>

<llo_original>
// kernel: tpu_custom_call.1
$region0: #{tpu_custom_call.1}
  #allocation0 [shape = 'u32[]', space=smem, size = 0x4, offset = 0x4, fixed_abs, tag = 'smem constant byte address 0x4 - core index']
  #allocation1 [shape = 'u32[144,128]{1,0:T(1,128)}', space=vmem, size = 0x12000, scoped, tag = 'internal scratch']
  %s0 = inlined_call_operand.hbm [shape: f32[512,128], index: 0, kind: input, shape index: {}]
  %s1 = inlined_call_operand.vmem [shape: f32[20,128], index: 1, kind: input, shape index: {}]
  %s2 = inlined_call_operand.vmem [shape: f32[20,1], index: 2, kind: input, shape index: {}]
  %s3 = inlined_call_operand.hbm [shape: f32[20,512], index: 3, kind: output, shape index: {}]
  %s4 = sld [smem:[#allocation0]]
  $region49: #{tpu_custom_call.1} parent=0
    _
  %s6 = ssub.s32 1, %s4
  %s7 = scalar_select 0, %s6, %s4
  $region1: #{tpu_custom_call.1} parent=0
    #allocation2 [shape = 'u8[262144]{0}', space=vmem, size = 0x40000, scoped, tag = 'input window, operand 0']
    #allocation3 [shape = 's32[2]{0}', space=sflag, size = 0x8, scoped, tag = 'scoped memory for tpu_custom_call.1']
    #allocation4 [shape = 's32[2]{0}', space=sflag, size = 0x8, scoped, tag = 'scoped memory for tpu_custom_call.1']
    #allocation5 [shape = 'u8[49152]{0}', space=vmem, size = 0xc000, scoped, tag = 'output window, operand 0']
    %8 = vsyncpa [#allocation3], 0
    %s9 = scalar_lea.sflag [#allocation3], 1
    %10 = vsyncpa %s9, 0
    %11 = vsyncpa [#allocation4], 0
    %s12 = scalar_lea.sflag [#allocation4], 1
    %13 = vsyncpa %s12, 0
    loop: start=0, step=1, limit=4
    $region2: #{tpu_custom_call.1} parent=1 // loop_pre_header
      _
    $region3: #{tpu_custom_call.1} parent=1 // loop_header
      %s15 = sphi 0, %s19
      %p16 = scmp.ge.s32.totalorder %s15, 4
      %s25 = sphi 0, %s27
      %s28 = sphi 0, %s25
      %s29 = sphi 0, %s28
      %s45 = sphi 0, %s29
      %s49 = sphi 0, %s49
      %s51 = sphi 0, %s49
      %s52 = sphi 0, %s51
      %s66 = sphi 0, %s52
      %s70 = sphi 0, %s70
      %s72 = sphi 0, %s70
      %s73 = sphi 0, %s72
      %s87 = sphi 0, %s73
      %s93 = sphi 0, %s95
      %s96 = sphi 0, %s93
      %s97 = sphi 0, %s96
      %s113 = sphi 0, %s97
    $region4: #{tpu_custom_call.1} parent=1 // loop_header_branch
      %18 = sbr.rel (%p16) target = $region8
    $region5: #{tpu_custom_call.1} parent=1 // loop_body
      %s20 = ssub.s32 %s15, 1
      %s21 = ssub.s32 %s15, 2
      %s22 = sadd.s32 %s15, 1
      %s23 = ssub.s32 %s15, %s22
      %p24 = scmp.eq.s32.totalorder %s23, 0
      %s26 = sadd.s32 %s25, 1
      %s27 = scalar_select %p24, %s25, %s26
      %p30 = pneg %p24
      %p31 = scmp.eq.s32.totalorder %s15, 1
      %p32 = por %p30, %p31
      %p33 = scmp.ne.s32.totalorder %s25, %s28
      %p34 = scmp.eq.s32.totalorder %s15, 0
      %p35 = por %p33, %p34
      %p36 = scmp.ne.s32.totalorder %s25, %s28
      %p37 = scmp.eq.s32.totalorder %s20, 1
      %p38 = por %p36, %p37
      %p39 = scmp.ne.s32.totalorder %s28, %s29
      %p40 = scmp.eq.s32.totalorder %s20, 0
      %p41 = por %p39, %p40
      %p42 = scmp.ne.s32.totalorder %s28, %s29
      %p43 = scmp.eq.s32.totalorder %s21, 1
      %p44 = por %p42, %p43
      %p46 = scmp.ne.s32.totalorder %s29, %s45
      %p47 = scmp.eq.s32.totalorder %s21, 0
      %p48 = por %p46, %p47
      %s50 = sadd.s32 %s49, 1
      %p53 = scmp.eq.s32.totalorder %s15, 1
      %p54 = scmp.ne.s32.totalorder %s49, %s51
      %p55 = scmp.eq.s32.totalorder %s15, 0
      %p56 = por %p54, %p55
      %p57 = scmp.ne.s32.totalorder %s49, %s51
      %p58 = scmp.eq.s32.totalorder %s20, 1
      %p59 = por %p57, %p58
      %p60 = scmp.ne.s32.totalorder %s51, %s52
      %p61 = scmp.eq.s32.totalorder %s20, 0
      %p62 = por %p60, %p61
      %p63 = scmp.ne.s32.totalorder %s51, %s52
      %p64 = scmp.eq.s32.totalorder %s21, 1
      %p65 = por %p63, %p64
      %p67 = scmp.ne.s32.totalorder %s52, %s66
      %p68 = scmp.eq.s32.totalorder %s21, 0
      %p69 = por %p67, %p68
      %s71 = sadd.s32 %s70, 1
      %p74 = scmp.eq.s32.totalorder %s15, 1
      %p75 = scmp.ne.s32.totalorder %s70, %s72
      %p76 = scmp.eq.s32.totalorder %s15, 0
      %p77 = por %p75, %p76
      %p78 = scmp.ne.s32.totalorder %s70, %s72
      %p79 = scmp.eq.s32.totalorder %s20, 1
      %p80 = por %p78, %p79
      %p81 = scmp.ne.s32.totalorder %s72, %s73
      %p82 = scmp.eq.s32.totalorder %s20, 0
      %p83 = por %p81, %p82
      %p84 = scmp.ne.s32.totalorder %s72, %s73
      %p85 = scmp.eq.s32.totalorder %s21, 1
      %p86 = por %p84, %p85
      %p88 = scmp.ne.s32.totalorder %s73, %s87
      %p89 = scmp.eq.s32.totalorder %s21, 0
      %p90 = por %p88, %p89
      %s91 = ssub.s32 %s15, %s22
      %p92 = scmp.eq.s32.totalorder %s91, 0
      %s94 = sadd.s32 %s93, 1
      %s95 = scalar_select %p92, %s93, %s94
      %p98 = pneg %p92
      %p99 = scmp.eq.s32.totalorder %s15, 1
      %p100 = por %p98, %p99
      %p101 = scmp.ne.s32.totalorder %s93, %s96
      %p102 = scmp.eq.s32.totalorder %s15, 0
      %p103 = por %p101, %p102
      %p104 = scmp.ne.s32.totalorder %s93, %s96
      %p105 = scmp.eq.s32.totalorder %s20, 1
      %p106 = por %p104, %p105
      %p107 = scmp.ne.s32.totalorder %s96, %s97
      %p108 = scmp.eq.s32.totalorder %s20, 0
      %p109 = por %p107, %p108
      %p110 = scmp.ne.s32.totalorder %s96, %s97
      %p111 = scmp.eq.s32.totalorder %s21, 1
      %p112 = por %p110, %p111
      %p114 = scmp.ne.s32.totalorder %s97, %s113
      %p115 = scmp.eq.s32.totalorder %s21, 0
      %p116 = por %p114, %p115
      %p117 = scmp.le.s32.totalorder 1, %s15
      %p118 = scmp.lt.s32.totalorder %s15, 3
      %p119 = pnand %p117, %p118
      %p120 = pneg %p119
      // Predicated region
      $region9: #{tpu_custom_call.1} parent=5 // pred_check
        _
      $region10: #{tpu_custom_call.1} parent=5 // pred_check_branch
        %122 = sbr.rel (%p119) target = $region12
      $region11: #{tpu_custom_call.1} parent=5 // pred_region
        %s123 = ssub.s32 %s15, 1
        // Predicated region
        $region13: #{tpu_custom_call.1} parent=11 // pred_check
          %p124 = pneg %p62
        $region14: #{tpu_custom_call.1} parent=11 // pred_check_branch
          %126 = sbr.rel (%p124) target = $region16
        $region15: #{tpu_custom_call.1} parent=11 // pred_region
          _
        $region16: #{tpu_custom_call.1} parent=11 // pred_fallthru
          _
        // Predicated region
        $region17: #{tpu_custom_call.1} parent=11 // pred_check
          %p127 = pneg %p83
        $region18: #{tpu_custom_call.1} parent=11 // pred_check_branch
          %129 = sbr.rel (%p127) target = $region20
        $region19: #{tpu_custom_call.1} parent=11 // pred_region
          _
        $region20: #{tpu_custom_call.1} parent=11 // pred_fallthru
          _
      $region12: #{tpu_custom_call.1} parent=5 // pred_fallthru
        _
      %p130 = scmp.lt.s32.totalorder %s15, 2
      // Predicated region
      $region21: #{tpu_custom_call.1} parent=5 // pred_check
        %p131 = pneg %p130
      $region22: #{tpu_custom_call.1} parent=5 // pred_check_branch
        %133 = sbr.rel (%p131) target = $region24
      $region23: #{tpu_custom_call.1} parent=5 // pred_region
        // Predicated region
        $region25: #{tpu_custom_call.1} parent=23 // pred_check
          %p134 = pneg %p35
        $region26: #{tpu_custom_call.1} parent=23 // pred_check_branch
          %136 = sbr.rel (%p134) target = $region28
        $region27: #{tpu_custom_call.1} parent=23 // pred_region
          %s137 = sand.u32 %s25, 1
          %s138 = scalar_lea.sflag [#allocation3], %s137
          %s139 = sand.u32 %s25, 1
          %s140 = smul.addr %s139, 256
          %s141 = scalar_lea.vmem [#allocation2], %s140
          %s142 = smul.u32 32, %s15
          %s144 = ssub.s32 4096, 4096
          %145 = vsyncadd %s138, %s144
          %s146 = smul.addr %s142, 128
          %s147 = scalar_lea.hbm %s0, %s146
          %s148 = sshll.u32 %s141, 4
          %s149 = int_to_ptr.vmem [resolvable:$true] %s148
          %154 = dma.hbm_to_vmem [thread:$0]  %s147, 4096, %s149, %s138, 128, 128, 8
        $region28: #{tpu_custom_call.1} parent=23 // pred_fallthru
          _
      $region24: #{tpu_custom_call.1} parent=5 // pred_fallthru
        _
      %p155 = scmp.le.s32.totalorder 1, %s15
      %p156 = scmp.lt.s32.totalorder %s15, 3
      %p157 = pnand %p155, %p156
      %p158 = pneg %p157
      // Predicated region
      $region29: #{tpu_custom_call.1} parent=5 // pred_check
        _
      $region30: #{tpu_custom_call.1} parent=5 // pred_check_branch
        %160 = sbr.rel (%p157) target = $region32
      $region31: #{tpu_custom_call.1} parent=5 // pred_region
        %s161 = ssub.s32 %s15, 1
        %s162 = sand.u32 %s28, 1
        %s163 = scalar_lea.sflag [#allocation3], %s162
        %s164 = sand.u32 %s28, 1
        %s165 = smul.addr %s164, 256
        %s166 = scalar_lea.vmem [#allocation2], %s165
        // Predicated region
        $region33: #{tpu_custom_call.1} parent=31 // pred_check
          %p167 = pneg %p41
        $region34: #{tpu_custom_call.1} parent=31 // pred_check_branch
          %169 = sbr.rel (%p167) target = $region36
        $region35: #{tpu_custom_call.1} parent=31 // pred_region
          %170 = dma.done %s163, 4096
        $region36: #{tpu_custom_call.1} parent=31 // pred_fallthru
          _
        %s171 = sand.u32 %s28, 1
        %s172 = scalar_lea.sflag [#allocation3], %s171
        %s173 = sand.u32 %s28, 1
        %s174 = smul.addr %s173, 256
        %s175 = scalar_lea.vmem [#allocation2], %s174
        %p176 = pneg %p41
        %p177 = pneg %p38
        %p178 = pneg %p62
        %p179 = pneg %p59
        %p180 = pneg %p83
        %p181 = pneg %p80
        %p182 = pneg %p109
        %p183 = pneg %p106
        %s184 = sand.u32 %s96, 1
        %s185 = scalar_lea.sflag [#allocation4], %s184
        %s186 = sand.u32 %s96, 1
        %s187 = smul.addr %s186, 48
        %s188 = scalar_lea.vmem [#allocation5], %s187
        %s189 = smul.u32 32, %s20
        %s190 = smul.u32 2, %s20
        %v191 = vld [vmem:[%s1] sm:$0xff]
        %v192 = vld [vmem:[%s1 + $0x8] sm:$0xff]
        %v193 = vld [vmem:[%s1 + $0x10] sm:$0xf]
        %v194 = vld [vmem:[%s166] sm:$0xff]
        %v195 = vld [vmem:[%s166 + $0x8] sm:$0xff]
        %v196 = vld [vmem:[%s166 + $0x10] sm:$0xff]
        %v197 = vld [vmem:[%s166 + $0x18] sm:$0xff]
        %v198 = vld [vmem:[%s166 + $0x20] sm:$0xff]
        %v199 = vld [vmem:[%s166 + $0x28] sm:$0xff]
        %v200 = vld [vmem:[%s166 + $0x30] sm:$0xff]
        %v201 = vld [vmem:[%s166 + $0x38] sm:$0xff]
        %v202 = vld [vmem:[%s166 + $0x40] sm:$0xff]
        %v203 = vld [vmem:[%s166 + $0x48] sm:$0xff]
        %v204 = vld [vmem:[%s166 + $0x50] sm:$0xff]
        %v205 = vld [vmem:[%s166 + $0x58] sm:$0xff]
        %v206 = vld [vmem:[%s166 + $0x60] sm:$0xff]
        %v207 = vld [vmem:[%s166 + $0x68] sm:$0xff]
        %v208 = vld [vmem:[%s166 + $0x70] sm:$0xff]
        %v209 = vld [vmem:[%s166 + $0x78] sm:$0xff]
        %v210 = vld [vmem:[%s166 + $0x80] sm:$0xff]
        %v211 = vld [vmem:[%s166 + $0x88] sm:$0xff]
        %v212 = vld [vmem:[%s166 + $0x90] sm:$0xff]
        %v213 = vld [vmem:[%s166 + $0x98] sm:$0xff]
        %v214 = vld [vmem:[%s166 + $0xa0] sm:$0xff]
        %v215 = vld [vmem:[%s166 + $0xa8] sm:$0xff]
        %v216 = vld [vmem:[%s166 + $0xb0] sm:$0xff]
        %v217 = vld [vmem:[%s166 + $0xb8] sm:$0xff]
        %v218 = vld [vmem:[%s166 + $0xc0] sm:$0xff]
        %v219 = vld [vmem:[%s166 + $0xc8] sm:$0xff]
        %v220 = vld [vmem:[%s166 + $0xd0] sm:$0xff]
        %v221 = vld [vmem:[%s166 + $0xd8] sm:$0xff]
        %v222 = vld [vmem:[%s166 + $0xe0] sm:$0xff]
        %v223 = vld [vmem:[%s166 + $0xe8] sm:$0xff]
        %v224 = vld [vmem:[%s166 + $0xf0] sm:$0xff]
        %v225 = vld [vmem:[%s166 + $0xf8] sm:$0xff]
        %226 = vmatprep.subr.mxu0 0.0
        %227 = vmatpush1.xpose.msra.mxu0 %v194
        %228 = vmatprep.subr.mxu0 0.0
        %229 = vmatpush1.xpose.msra.mxu0 %v195
        %230 = vmatprep.subr.mxu0 0.0
        %231 = vmatpush1.xpose.msra.mxu0 %v196
        %232 = vmatprep.subr.mxu0 0.0
        %233 = vmatpush1.xpose.msra.mxu0 %v197
        %234 = vmatprep.subr.mxu0 0.0
        %235 = vmatpush1.xpose.msra.mxu0 %v198
        %236 = vmatprep.subr.mxu0 0.0
        %237 = vmatpush1.xpose.msra.mxu0 %v199
        %238 = vmatprep.subr.mxu0 0.0
        %239 = vmatpush1.xpose.msra.mxu0 %v200
        %240 = vmatprep.subr.mxu0 0.0
        %241 = vmatpush1.xpose.msra.mxu0 %v201
        %242 = vmatprep.subr.mxu0 0.0
        %243 = vmatpush1.xpose.msra.mxu0 %v202
        %244 = vmatprep.subr.mxu0 0.0
        %245 = vmatpush1.xpose.msra.mxu0 %v203
        %246 = vmatprep.subr.mxu0 0.0
        %247 = vmatpush1.xpose.msra.mxu0 %v204
        %248 = vmatprep.subr.mxu0 0.0
        %249 = vmatpush1.xpose.msra.mxu0 %v205
        %250 = vmatprep.subr.mxu0 0.0
        %251 = vmatpush1.xpose.msra.mxu0 %v206
        %252 = vmatprep.subr.mxu0 0.0
        %253 = vmatpush1.xpose.msra.mxu0 %v207
        %254 = vmatprep.subr.mxu0 0.0
        %255 = vmatpush1.xpose.msra.mxu0 %v208
        %256 = vmatprep.subr.mxu0 0.0
        %257 = vmatpush1.xpose.msra.mxu0 %v209
        %258 = vmatprep.subr.mxu0 0.0
        %259 = vmatpush1.xpose.msra.mxu0 %v210
        %260 = vmatprep.subr.mxu0 0.0
        %261 = vmatpush1.xpose.msra.mxu0 %v211
        %262 = vmatprep.subr.mxu0 0.0
        %263 = vmatpush1.xpose.msra.mxu0 %v212
        %264 = vmatprep.subr.mxu0 0.0
        %265 = vmatpush1.xpose.msra.mxu0 %v213
        %266 = vmatprep.subr.mxu0 0.0
        %267 = vmatpush1.xpose.msra.mxu0 %v214
        %268 = vmatprep.subr.mxu0 0.0
        %269 = vmatpush1.xpose.msra.mxu0 %v215
        %270 = vmatprep.subr.mxu0 0.0
        %271 = vmatpush1.xpose.msra.mxu0 %v216
        %272 = vmatprep.subr.mxu0 0.0
        %273 = vmatpush1.xpose.msra.mxu0 %v217
        %274 = vmatprep.subr.mxu0 0.0
        %275 = vmatpush1.xpose.msra.mxu0 %v218
        %276 = vmatprep.subr.mxu0 0.0
        %277 = vmatpush1.xpose.msra.mxu0 %v219
        %278 = vmatprep.subr.mxu0 0.0
        %279 = vmatpush1.xpose.msra.mxu0 %v220
        %280 = vmatprep.subr.mxu0 0.0
        %281 = vmatpush1.xpose.msra.mxu0 %v221
        %282 = vmatprep.subr.mxu0 0.0
        %283 = vmatpush1.xpose.msra.mxu0 %v222
        %284 = vmatprep.subr.mxu0 0.0
        %285 = vmatpush1.xpose.msra.mxu0 %v223
        %286 = vmatprep.subr.mxu0 0.0
        %287 = vmatpush1.xpose.msra.mxu0 %v224
        %288 = vmatprep.subr.mxu0 0.0
        %289 = vmatpush1.xpose.msra.mxu0 %v225
        %290 = vmatprep.mubr.f32.mxu0 0.0
        %291 = vmatmul.mubr.f32.gmra.mrb[0].mxu0 %v191
        %v292 = vpop.f32.mrb[0].mxu0
        %v293 = vadd.f32 0.0, %v292
        %v294 = vpop.f32.mrb[0].mxu0
        %v295 = vadd.f32 0.0, %v294
        %296 = vmatprep.mubr.f32.mxu0 0.0
        %297 = vmatmul.mubr.f32.gmra.mrb[0].mxu0 %v192
        %v298 = vpop.f32.mrb[0].mxu0
        %v299 = vadd.f32 0.0, %v298
        %v300 = vpop.f32.mrb[0].mxu0
        %v301 = vadd.f32 0.0, %v300
        %302 = vmatprep.mubr.f32.mxu0 0.0
        %303 = vmatmul.mubr.f32.gmra.mrb[0].mxu0 %v193
        %v304 = vpop.f32.mrb[0].mxu0
        %v305 = vadd.f32 0.0, %v304
        %v306 = vpop.f32.mrb[0].mxu0
        %v307 = vadd.f32 0.0, %v306
        %308 = vdwg.mxu0
        %v309 = vld [vmem:[%s2] sm:$0xff]
        %v310 = vld [vmem:[%s2 + $0x8] sm:$0xff]
        %v311 = vld [vmem:[%s2 + $0x10] sm:$0xf]
        %313 = vset.pattern.permute.xlu0 0
        %314 = vperm.xlu0 %313, %v309
        %v315 = vpop.permute.xlu0 %314
        %318 = vset.pattern.permute.xlu0 0
        %319 = vperm.xlu0 %318, %v310
        %v320 = vpop.permute.xlu0 %319
        %323 = vset.pattern.permute.xlu0 0
        %324 = vperm.xlu0 %323, %v311
        %v325 = vpop.permute.xlu0 %324
        %v327 = vmul.f32 %v293, %v315
        %v328 = vmul.f32 %v295, %v315
        %v329 = vmul.f32 %v299, %v320
        %v330 = vmul.f32 %v301, %v320
        %v331 = vmul.f32 %v305, %v325
        %v332 = vmul.f32 %v307, %v325
        %333 = vst [vmem:[%s188] sm:$0xff] %v327
        %334 = vst [vmem:[%s188 + $0x8] sm:$0xff] %v328
        %335 = vst [vmem:[%s188 + $0x10] sm:$0xff] %v329
        %336 = vst [vmem:[%s188 + $0x18] sm:$0xff] %v330
        %337 = vst [vmem:[%s188 + $0x20] sm:$0xf] %v331
        %338 = vst [vmem:[%s188 + $0x28] sm:$0xf] %v332
        %s339 = sand.u32 %s96, 1
        %s340 = scalar_lea.sflag [#allocation4], %s339
        %s341 = sand.u32 %s96, 1
        %s342 = smul.addr %s341, 48
        %s343 = scalar_lea.vmem [#allocation5], %s342
        // Predicated region
        $region37: #{tpu_custom_call.1} parent=31 // pred_check
          %p344 = pneg %p106
        $region38: #{tpu_custom_call.1} parent=31 // pred_check_branch
          %346 = sbr.rel (%p344) target = $region40
        $region39: #{tpu_custom_call.1} parent=31 // pred_region
          %s347 = smul.u32 2, %s20
          %s349 = ssub.s32 768, 768
          %350 = vsyncadd %s340, %s349
          %s351 = smul.addr %s347, 128
          %s352 = scalar_lea.hbm %s3, %s351
          %s353 = sshll.u32 %s343, 4
          %s354 = int_to_ptr.vmem [resolvable:$true] %s353
          %359 = dma.vmem_to_hbm [thread:$0]  %s354, 768, %s352, %s340, 256, 512, 16
        $region40: #{tpu_custom_call.1} parent=31 // pred_fallthru
          _
      $region32: #{tpu_custom_call.1} parent=5 // pred_fallthru
        _
      %p360 = scmp.le.s32.totalorder 2, %s15
      // Predicated region
      $region41: #{tpu_custom_call.1} parent=5 // pred_check
        %p361 = pneg %p360
      $region42: #{tpu_custom_call.1} parent=5 // pred_check_branch
        %363 = sbr.rel (%p361) target = $region44
      $region43: #{tpu_custom_call.1} parent=5 // pred_region
        %s364 = ssub.s32 %s15, 2
        // Predicated region
        $region45: #{tpu_custom_call.1} parent=43 // pred_check
          %p365 = pneg %p112
        $region46: #{tpu_custom_call.1} parent=43 // pred_check_branch
          %367 = sbr.rel (%p365) target = $region48
        $region47: #{tpu_custom_call.1} parent=43 // pred_region
          %s368 = sand.u32 %s97, 1
          %s369 = scalar_lea.sflag [#allocation4], %s368
          %s370 = sand.u32 %s97, 1
          %s371 = smul.addr %s370, 48
          %s372 = scalar_lea.vmem [#allocation5], %s371
          %373 = dma.done %s369, 768
        $region48: #{tpu_custom_call.1} parent=43 // pred_fallthru
          _
      $region44: #{tpu_custom_call.1} parent=5 // pred_fallthru
        _
    $region6: #{tpu_custom_call.1} parent=1 // loop_footer
      %s19 = sadd.s32 1, %s15
    $region7: #{tpu_custom_call.1} parent=1 // loop_footer_branch
      %14 = sbr.rel target = $region3
    $region8: #{tpu_custom_call.1} parent=1 // loop_exit
      _
    %374 = vsyncpa [#allocation3], 1
    %s375 = scalar_lea.sflag [#allocation3], 1
    %376 = vsyncpa %s375, 1
    %377 = vsyncpa [#allocation4], 1
    %s378 = scalar_lea.sflag [#allocation4], 1
    %379 = vsyncpa %s378, 1

</llo_original>
